<compile_context>
chip_gen: v5e
topology: v5e:2x2
jax: 0.10.0
libtpu: 0.0.40
codegen_flags: <defaults>
</compile_context>

<pallas_src>
import functools

import jax
import jax.numpy as jnp
from jax import lax
from jax.experimental import pallas as pl
from jax.experimental.pallas import tpu as pltpu


def _round_up(x: int, m: int) -> int:
    return ((x + m - 1) // m) * m


def _tpu_vmem_capacity_bytes() -> int:
    try:
        return int(pltpu.get_tpu_info().vmem_capacity_bytes)
    except Exception:
        return 128 * 1024 * 1024


def _tpu_num_tensorcores() -> int:
    try:
        info = pltpu.get_tpu_info()
        for name in ("num_cores", "tensor_cores_per_chip", "num_tensorcores",
                     "cores_per_chip"):
            v = getattr(info, name, None)
            if v:
                return int(v)
    except Exception:
        pass
    return 1


def _single_pass_kernel(acc_dtype, x_ref, o_ref):
    # Whole H*W row resident in VMEM: one fused reduce per row tile.
    o_ref[...] = jnp.sum(
        x_ref[...], axis=-1, keepdims=True, dtype=acc_dtype
    ).astype(o_ref.dtype)


def _tiled_kernel(hw, hw_tile, needs_mask, acc_dtype, x_ref, o_ref, acc_ref):
    # Grid: (row tiles, hw tiles); reduction axis last, accumulator persists.
    j = pl.program_id(1)

    @pl.when(j == 0)
    def _init():
        acc_ref[...] = jnp.zeros_like(acc_ref)

    x = x_ref[...]
    if needs_mask:
        col = j * hw_tile + lax.broadcasted_iota(jnp.int32, x.shape, 1)
        x = jnp.where(col < hw, x, jnp.zeros_like(x))
    acc_ref[...] += jnp.sum(x, axis=-1, keepdims=True, dtype=acc_dtype)

    @pl.when(j == pl.num_programs(1) - 1)
    def _finalize():
        o_ref[...] = acc_ref[...].astype(o_ref.dtype)


@jax.jit
def global_sum_pool2d(x: jax.Array) -> jax.Array:
    """Pallas TPU GlobalSumPool2d: x (N, C, H, W) -> x.sum over (-2, -1)."""
    n, c, h, w = x.shape
    r = n * c
    hw = h * w
    dtype = x.dtype
    itemsize = jnp.dtype(dtype).itemsize
    acc_dtype = jnp.float32 if jnp.issubdtype(dtype, jnp.floating) else jnp.int32
    # TODO(synk): torch.sum promotes integer inputs to int64; we keep x.dtype.

    # (N, C, H, W) -> (N*C, H*W): contiguous, so layout plumbing only.
    x2 = x.reshape(r, hw)

    vmem_cap = _tpu_vmem_capacity_bytes()
    num_cores = _tpu_num_tensorcores()

    # Block budget: ~12 MiB on small-VMEM/high-BW chips (v7x), 8 MiB elsewhere.
    target_block_bytes = 12 * 2**20 if vmem_cap <= 64 * 2**20 else 8 * 2**20

    base_rows = max(8, 32 // max(1, itemsize))   # 8 f32, 16 bf16, 32 int8
    hw_pad = _round_up(hw, 128)                  # lane padding in VMEM
    row_bytes = hw_pad * itemsize                # padded bytes per row

    if base_rows * row_bytes <= target_block_bytes:
        # ---------- Fast path: full H*W row per block, 1-D grid over rows.
        max_rows = max(base_rows,
                       (target_block_bytes // row_bytes) // base_rows * base_rows)
        if r <= base_rows:
            r_tile = r
        elif r % base_rows == 0 and r <= max_rows:
            r_tile = r
        else:
            r_tile = max(base_rows, min(max_rows, (r // base_rows) * base_rows))
        hw_tile_eff = hw
        grid = (pl.cdiv(r, r_tile),)
        in_specs = [pl.BlockSpec((r_tile, hw), lambda i: (i, 0))]
        out_specs = pl.BlockSpec((r_tile, 1), lambda i: (i, 0))
        scratch_shapes = []
        kernel = functools.partial(_single_pass_kernel, acc_dtype)
    else:
        # ---------- Tiled reduction path: bounded blocks, masked tail.
        r_tile = base_rows if r > base_rows else r
        hw_tile = (target_block_bytes // (max(r_tile, base_rows) * itemsize)) // 128 * 128
        hw_tile = max(128, min(hw_tile, hw_pad))
        hw_tile_eff = hw_tile
        needs_mask = (hw % hw_tile) != 0
        grid = (pl.cdiv(r, r_tile), pl.cdiv(hw, hw_tile))
        in_specs = [pl.BlockSpec((r_tile, hw_tile), lambda i, j: (i, j))]
        out_specs = pl.BlockSpec((r_tile, 1), lambda i, j: (i, 0))
        scratch_shapes = [pltpu.VMEM((r_tile, 1), acc_dtype)]
        kernel = functools.partial(_tiled_kernel, hw, hw_tile, needs_mask, acc_dtype)

    # Rows axis: shard across TensorCores when the chip has more than one.
    rows_sem = pltpu.PARALLEL
    if num_cores >= 2 and grid[0] >= num_cores:
        rows_sem = pltpu.CORE_PARALLEL
    dim_sems = (rows_sem,) if len(grid) == 1 else (rows_sem, pltpu.ARBITRARY)

    # VMEM accounting with lane/sublane padding.
    r_tile_pad = _round_up(r_tile, base_rows)
    block_bytes = r_tile_pad * _round_up(hw_tile_eff, 128) * itemsize
    vmem_limit = max(16 * 2**20, 4 * block_bytes)
    vmem_limit = int(min(vmem_limit, 48 * 2**20,
                         max(16 * 2**20, vmem_cap - 16 * 2**20)))

    out = pl.pallas_call(
        kernel,
        out_shape=jax.ShapeDtypeStruct((r, 1), dtype),
        grid_spec=pltpu.PrefetchScalarGridSpec(
            num_scalar_prefetch=0,
            grid=grid,
            in_specs=in_specs,
            out_specs=out_specs,
            scratch_shapes=scratch_shapes,
        ),
        compiler_params=pltpu.CompilerParams(
            dimension_semantics=dim_sems,
            vmem_limit_bytes=vmem_limit,
        ),
        cost_estimate=pl.CostEstimate(
            flops=r * hw,
            transcendentals=0,
            bytes_accessed=r * hw * itemsize + r * itemsize,
        ),
    )(x2)

    return out.reshape(n, c)


if __name__ == "__main__":
    key = jax.random.PRNGKey(0)
    x = jax.random.normal(key, (2, 4, 16, 16), dtype=jnp.float32)

    out = jax.block_until_ready(global_sum_pool2d(x))

    # Reference: same semantics as torch x.sum(dim=(-2, -1)).
    ref = jnp.sum(x, axis=(-2, -1))
    assert out.shape == (2, 4), out.shape
    assert out.dtype == x.dtype, out.dtype
    assert jnp.allclose(out, ref, atol=1e-5, rtol=1e-5), "mismatch vs reference"

    print("KERNEL_OK")
</pallas_src>

<mosaic_0001>
module attributes {stable_mosaic.version = 11 : i64} {
  func.func @_single_pass_kernel(%arg0: i32, %arg1: memref<8x256xf32, #tpu.memory_space<vmem>>, %arg2: memref<8x1xf32, #tpu.memory_space<vmem>>) attributes {dimension_semantics = [#tpu.dimension_semantics<parallel>], iteration_bounds = array<i64: 1>, scalar_prefetch = 0 : i64, scratch_operands = 0 : i64, tpu.core_type = #tpu.core_type<tc>, window_params = [{transform_indices = @transform_0, window_bounds = array<i64: 8, 256>}, {transform_indices = @transform_1, window_bounds = array<i64: 8, 1>}]} {
    %c0 = arith.constant 0 : index
    %c0_0 = arith.constant 0 : index
    %0 = vector.load %arg1[%c0, %c0_0] : memref<8x256xf32, #tpu.memory_space<vmem>>, vector<8x256xf32>
    %cst = arith.constant dense<0.000000e+00> : vector<8xf32>
    %1 = vector.multi_reduction <add>, %0, %cst [1] : vector<8x256xf32> to vector<8xf32>
    %2 = vector.shape_cast %1 : vector<8xf32> to vector<8x1xf32>
    %c0_1 = arith.constant 0 : index
    %c0_2 = arith.constant 0 : index
    %3 = vector.load %arg2[%c0_1, %c0_2] : memref<8x1xf32, #tpu.memory_space<vmem>>, vector<8x1xf32>
    tpu.vector_store %arg2[%c0_1, %c0_2], %2 {strides = array<i32>} : memref<8x1xf32, #tpu.memory_space<vmem>>, vector<8x1xf32>,
    return
  }
  func.func @transform_0(%arg0: i32) -> (i32, i32) {
    %c0_i32 = arith.constant 0 : i32
    %c0_i32_0 = arith.constant 0 : i32
    return %arg0, %c0_i32 : i32, i32
  }
  func.func @transform_1(%arg0: i32) -> (i32, i32) {
    %c0_i32 = arith.constant 0 : i32
    %c0_i32_0 = arith.constant 0 : i32
    return %arg0, %c0_i32 : i32, i32
  }
}

</mosaic_0001>

<llo_original>
// kernel: global_sum_pool2d.1
$region0: #{global_sum_pool2d.1}
  #allocation0 [shape = 'u32[]', space=smem, size = 0x4, offset = 0x4, fixed_abs, tag = 'smem constant byte address 0x4 - core index']
  #allocation1 [shape = 'u32[72,128]{1,0:T(1,128)}', space=vmem, size = 0x9000, scoped, tag = 'internal scratch']
  %s0 = inlined_call_operand.vmem [shape: f32[8,256], index: 0, kind: input, shape index: {}]
  %s1 = inlined_call_operand.vmem [shape: f32[8,1], index: 1, kind: output, shape index: {}]
  %s2 = sld [smem:[#allocation0]]
  $region14: #{global_sum_pool2d.1} parent=0
    _
  %s4 = ssub.s32 1, %s2
  %s5 = scalar_select 0, %s4, %s2
  // Predicated region
  $region2: #{global_sum_pool2d.1} parent=0 // pred_check
    _
  $region3: #{global_sum_pool2d.1} parent=0 // pred_check_branch
    %7 = sbr.rel (0) target = $region5
  $region4: #{global_sum_pool2d.1} parent=0 // pred_region
    _
  $region5: #{global_sum_pool2d.1} parent=0 // pred_fallthru
    _
  %v8 = vld [vmem:[%s0] sm:$0xff]
  %v9 = vld [vmem:[%s0 + $0x8] sm:$0xff]
  %v10 = vadd.f32 %v8, %v9
  %11 = vadd.xlane.f32.xlu0 %v10
  %v12 = vpop.xlane.xlu0 %11
  %vm13 = vcmask 7168
  %14 = vst.msk [vmem:[%s1] sm:$0xff] %vm13, %v12
  // Predicated region
  $region6: #{global_sum_pool2d.1} parent=0 // pred_check
    _
  $region7: #{global_sum_pool2d.1} parent=0 // pred_check_branch
    %16 = sbr.rel (0) target = $region9
  $region8: #{global_sum_pool2d.1} parent=0 // pred_region
    _
  $region9: #{global_sum_pool2d.1} parent=0 // pred_fallthru
    _
  // Predicated region
  $region10: #{global_sum_pool2d.1} parent=0 // pred_check
    _
  $region11: #{global_sum_pool2d.1} parent=0 // pred_check_branch
    %18 = sbr.rel (0) target = $region13
  $region12: #{global_sum_pool2d.1} parent=0 // pred_region
    _
  $region13: #{global_sum_pool2d.1} parent=0 // pred_fallthru
    _

</llo_original>
